<compile_context>
chip_gen: v7x
topology: tpu7x:2x2x1
jax: 0.10.0
libtpu: 0.0.40
codegen_flags: <defaults>
</compile_context>

<pallas_src>
import functools

import jax
import jax.numpy as jnp
from jax.experimental import pallas as pl
from jax.experimental.pallas import tpu as pltpu

KH = KW = 3  # conv kernel size
PAD = 1      # padding=1, stride=1 -> "same" output size


def _conv3x3_im2col_kernel(x_ref, w_ref, b_ref, o_ref, a_ref, *, cin, h, w):
    """One batch element: 3x3 conv as a single im2col matmul.

    x_ref : (Cin, BUF)          flattened, spatially zero-padded image
                                (row-major over (H+2, W+2), zero tail to BUF)
    w_ref : (Cout, KH*KW*Cin)   weight matrix, K ordered (kh, kw, cin)
    b_ref : (Cout, 1)           bias column
    o_ref : (Cout, H*(W+2))     output "strip" (2 garbage cols per row)
    a_ref : (KH*KW*Cin, H*(W+2)) VMEM scratch: the im2col matrix
    """
    p = w + 2 * PAD          # padded row width
    strip = h * p            # strip length (lane axis of the matmul)

    # --- build the im2col matrix A: 9 contiguous lane-shifted slices ---------
    # Row block t = (kh, kw) of A is the flattened padded image shifted by
    # kh*p + kw.  Every row of A is (re)written each grid step, so the scratch
    # never needs initialization.
    for t in range(KH * KW):
        kh, kw = divmod(t, KW)
        s = kh * p + kw                                   # static lane offset
        a_ref[t * cin:(t + 1) * cin, :] = x_ref[:, s:s + strip]

    # --- one MXU matmul: (Cout, 27) @ (27, strip) -> (Cout, strip) -----------
    acc = jnp.dot(w_ref[...], a_ref[...], preferred_element_type=jnp.float32)
    acc = acc + b_ref[...]                                # bias over lanes
    o_ref[...] = acc.astype(o_ref.dtype)


@jax.jit
def conv2d_3x3_pallas(x_nchw, weight_oihw, bias):
    """PyTorch-semantics Conv2d(3, 64, k=3, s=1, p=1).

    x_nchw      : (N, Cin, H, W)      float32
    weight_oihw : (Cout, Cin, KH, KW) float32 (PyTorch layout)
    bias        : (Cout,)             float32
    returns     : (N, Cout, H, W)     float32
    """
    N, Cin, H, W = x_nchw.shape
    Cout = weight_oihw.shape[0]
    P = W + 2 * PAD                 # padded width
    STRIP = H * P                   # matmul N dim (lane axis), e.g. 288
    FLAT = (H + 2 * PAD) * P        # flattened padded image length, e.g. 324
    K = KH * KW * Cin               # contraction depth, 27
    # Headroom so the largest tap slice stays in-bounds, rounded to lane tiles.
    BUF = max(FLAT, (KH - 1) * P + (KW - 1) + STRIP)
    BUF = ((BUF + 127) // 128) * 128

    # ---- wrapper-side plumbing: pads + tiny weight reshape only (no activation
    #      transposes; everything below fuses under jit) -----------------------
    x_pad = jnp.pad(x_nchw, ((0, 0), (0, 0), (PAD, PAD), (PAD, PAD)))
    x_flat = x_pad.reshape(N, Cin, FLAT)
    x_flat = jnp.pad(x_flat, ((0, 0), (0, 0), (0, BUF - FLAT)))

    # K ordering (kh, kw, cin) to match the row order of A built in the kernel.
    w_mat = jnp.transpose(weight_oihw, (0, 2, 3, 1)).reshape(Cout, K)
    b_col = bias.reshape(Cout, 1)

    kernel = functools.partial(_conv3x3_im2col_kernel, cin=Cin, h=H, w=W)

    out_strip = pl.pallas_call(
        kernel,
        out_shape=jax.ShapeDtypeStruct((N, Cout, STRIP), x_nchw.dtype),
        grid_spec=pltpu.PrefetchScalarGridSpec(
            num_scalar_prefetch=0,
            grid=(N,),
            in_specs=[
                pl.BlockSpec((None, Cin, BUF), lambda n: (n, 0, 0)),
                pl.BlockSpec((Cout, K), lambda n: (0, 0)),
                pl.BlockSpec((Cout, 1), lambda n: (0, 0)),
            ],
            out_specs=pl.BlockSpec((None, Cout, STRIP), lambda n: (n, 0, 0)),
            scratch_shapes=[pltpu.VMEM((K, STRIP), jnp.float32)],
        ),
        compiler_params=pltpu.CompilerParams(
            dimension_semantics=("parallel",)),   # batch across TCs on v7x
    )(x_flat, w_mat, b_col)

    # Valid output pixels live at strip position h*P + w with w < W; the two
    # trailing columns per row are the padding garbage -> drop them.
    out = out_strip.reshape(N, Cout, H, P)[..., :W]      # (N, Cout, H, W)
    return out


if __name__ == "__main__":
    # Deterministic parameter init (shapes from Net.__init__: Conv2d(3, 64, 3, 1, 1)).
    key = jax.random.PRNGKey(0)
    k_x, k_w, k_b = jax.random.split(key, 3)

    N, Cin, H, W, Cout = 2, 3, 16, 16, 64
    fan_in = Cin * KH * KW
    bound = 1.0 / jnp.sqrt(jnp.float32(fan_in))  # PyTorch-style uniform bound
    weight = jax.random.uniform(k_w, (Cout, Cin, KH, KW), jnp.float32, -bound, bound)
    bias = jax.random.uniform(k_b, (Cout,), jnp.float32, -bound, bound)

    x = jax.random.normal(k_x, (N, Cin, H, W), dtype=jnp.float32)

    out = conv2d_3x3_pallas(x, weight, bias)
    out = jax.block_until_ready(out)

    # Sanity check against XLA's reference convolution (same NCHW/OIHW semantics).
    ref = jax.lax.conv_general_dilated(
        x, weight, window_strides=(1, 1), padding=((PAD, PAD), (PAD, PAD)),
        dimension_numbers=("NCHW", "OIHW", "NCHW"),
    ) + bias.reshape(1, Cout, 1, 1)
    assert out.shape == (N, Cout, H, W)
    assert jnp.allclose(out, ref, atol=1e-4, rtol=1e-4)

    print("KERNEL_OK")
</pallas_src>

<mosaic_0001>
module attributes {stable_mosaic.version = 11 : i64} {
  func.func @_conv3x3_im2col_kernel(%arg0: i32, %arg1: memref<1x3x384xf32, #tpu.memory_space<vmem>>, %arg2: memref<64x27xf32, #tpu.memory_space<vmem>>, %arg3: memref<64x1xf32, #tpu.memory_space<vmem>>, %arg4: memref<1x64x288xf32, #tpu.memory_space<vmem>>, %arg5: memref<27x288xf32, #tpu.memory_space<vmem>>) attributes {dimension_semantics = [#tpu.dimension_semantics<parallel>], iteration_bounds = array<i64: 2>, scalar_prefetch = 0 : i64, scratch_operands = 1 : i64, tpu.core_type = #tpu.core_type<tc>, window_params = [{transform_indices = @transform_0, window_bounds = array<i64: 1, 3, 384>}, {pipeline_mode = #tpu.pipeline_mode<synchronous>, transform_indices = @transform_1, window_bounds = array<i64: 64, 27>}, {pipeline_mode = #tpu.pipeline_mode<synchronous>, transform_indices = @transform_2, window_bounds = array<i64: 64, 1>}, {transform_indices = @transform_3, window_bounds = array<i64: 1, 64, 288>}]} {
    %c0 = arith.constant 0 : index
    %c0_0 = arith.constant 0 : index
    %c0_1 = arith.constant 0 : index
    %0 = vector.load %arg1[%c0, %c0_0, %c0_1] : memref<1x3x384xf32, #tpu.memory_space<vmem>>, vector<1x3x288xf32>
    %1 = vector.shape_cast %0 : vector<1x3x288xf32> to vector<3x288xf32>
    %c0_2 = arith.constant 0 : index
    %c0_3 = arith.constant 0 : index
    %2 = vector.load %arg5[%c0_2, %c0_3] : memref<27x288xf32, #tpu.memory_space<vmem>>, vector<3x288xf32>
    tpu.vector_store %arg5[%c0_2, %c0_3], %1 {strides = array<i32>} : memref<27x288xf32, #tpu.memory_space<vmem>>, vector<3x288xf32>,
    %c0_4 = arith.constant 0 : index
    %c0_5 = arith.constant 0 : index
    %c1 = arith.constant 1 : index
    %3 = vector.load %arg1[%c0_4, %c0_5, %c1] : memref<1x3x384xf32, #tpu.memory_space<vmem>>, vector<1x3x288xf32>
    %4 = vector.shape_cast %3 : vector<1x3x288xf32> to vector<3x288xf32>
    %c3 = arith.constant 3 : index
    %c0_6 = arith.constant 0 : index
    %5 = vector.load %arg5[%c3, %c0_6] : memref<27x288xf32, #tpu.memory_space<vmem>>, vector<3x288xf32>
    tpu.vector_store %arg5[%c3, %c0_6], %4 {strides = array<i32>} : memref<27x288xf32, #tpu.memory_space<vmem>>, vector<3x288xf32>,
    %c0_7 = arith.constant 0 : index
    %c0_8 = arith.constant 0 : index
    %c2 = arith.constant 2 : index
    %6 = vector.load %arg1[%c0_7, %c0_8, %c2] : memref<1x3x384xf32, #tpu.memory_space<vmem>>, vector<1x3x288xf32>
    %7 = vector.shape_cast %6 : vector<1x3x288xf32> to vector<3x288xf32>
    %c6 = arith.constant 6 : index
    %c0_9 = arith.constant 0 : index
    %8 = vector.load %arg5[%c6, %c0_9] : memref<27x288xf32, #tpu.memory_space<vmem>>, vector<3x288xf32>
    tpu.vector_store %arg5[%c6, %c0_9], %7 {strides = array<i32>} : memref<27x288xf32, #tpu.memory_space<vmem>>, vector<3x288xf32>,
    %c0_10 = arith.constant 0 : index
    %c0_11 = arith.constant 0 : index
    %c18 = arith.constant 18 : index
    %9 = vector.load %arg1[%c0_10, %c0_11, %c18] : memref<1x3x384xf32, #tpu.memory_space<vmem>>, vector<1x3x288xf32>
    %10 = vector.shape_cast %9 : vector<1x3x288xf32> to vector<3x288xf32>
    %c9 = arith.constant 9 : index
    %c0_12 = arith.constant 0 : index
    %11 = vector.load %arg5[%c9, %c0_12] : memref<27x288xf32, #tpu.memory_space<vmem>>, vector<3x288xf32>
    tpu.vector_store %arg5[%c9, %c0_12], %10 {strides = array<i32>} : memref<27x288xf32, #tpu.memory_space<vmem>>, vector<3x288xf32>,
    %c0_13 = arith.constant 0 : index
    %c0_14 = arith.constant 0 : index
    %c19 = arith.constant 19 : index
    %12 = vector.load %arg1[%c0_13, %c0_14, %c19] : memref<1x3x384xf32, #tpu.memory_space<vmem>>, vector<1x3x288xf32>
    %13 = vector.shape_cast %12 : vector<1x3x288xf32> to vector<3x288xf32>
    %c12 = arith.constant 12 : index
    %c0_15 = arith.constant 0 : index
    %14 = vector.load %arg5[%c12, %c0_15] : memref<27x288xf32, #tpu.memory_space<vmem>>, vector<3x288xf32>
    tpu.vector_store %arg5[%c12, %c0_15], %13 {strides = array<i32>} : memref<27x288xf32, #tpu.memory_space<vmem>>, vector<3x288xf32>,
    %c0_16 = arith.constant 0 : index
    %c0_17 = arith.constant 0 : index
    %c20 = arith.constant 20 : index
    %15 = vector.load %arg1[%c0_16, %c0_17, %c20] : memref<1x3x384xf32, #tpu.memory_space<vmem>>, vector<1x3x288xf32>
    %16 = vector.shape_cast %15 : vector<1x3x288xf32> to vector<3x288xf32>
    %c15 = arith.constant 15 : index
    %c0_18 = arith.constant 0 : index
    %17 = vector.load %arg5[%c15, %c0_18] : memref<27x288xf32, #tpu.memory_space<vmem>>, vector<3x288xf32>
    tpu.vector_store %arg5[%c15, %c0_18], %16 {strides = array<i32>} : memref<27x288xf32, #tpu.memory_space<vmem>>, vector<3x288xf32>,
    %c0_19 = arith.constant 0 : index
    %c0_20 = arith.constant 0 : index
    %c36 = arith.constant 36 : index
    %18 = vector.load %arg1[%c0_19, %c0_20, %c36] : memref<1x3x384xf32, #tpu.memory_space<vmem>>, vector<1x3x288xf32>
    %19 = vector.shape_cast %18 : vector<1x3x288xf32> to vector<3x288xf32>
    %c18_21 = arith.constant 18 : index
    %c0_22 = arith.constant 0 : index
    %20 = vector.load %arg5[%c18_21, %c0_22] : memref<27x288xf32, #tpu.memory_space<vmem>>, vector<3x288xf32>
    tpu.vector_store %arg5[%c18_21, %c0_22], %19 {strides = array<i32>} : memref<27x288xf32, #tpu.memory_space<vmem>>, vector<3x288xf32>,
    %c0_23 = arith.constant 0 : index
    %c0_24 = arith.constant 0 : index
    %c37 = arith.constant 37 : index
    %21 = vector.load %arg1[%c0_23, %c0_24, %c37] : memref<1x3x384xf32, #tpu.memory_space<vmem>>, vector<1x3x288xf32>
    %22 = vector.shape_cast %21 : vector<1x3x288xf32> to vector<3x288xf32>
    %c21 = arith.constant 21 : index
    %c0_25 = arith.constant 0 : index
    %23 = vector.load %arg5[%c21, %c0_25] : memref<27x288xf32, #tpu.memory_space<vmem>>, vector<3x288xf32>
    tpu.vector_store %arg5[%c21, %c0_25], %22 {strides = array<i32>} : memref<27x288xf32, #tpu.memory_space<vmem>>, vector<3x288xf32>,
    %c0_26 = arith.constant 0 : index
    %c0_27 = arith.constant 0 : index
    %c38 = arith.constant 38 : index
    %24 = vector.load %arg1[%c0_26, %c0_27, %c38] : memref<1x3x384xf32, #tpu.memory_space<vmem>>, vector<1x3x288xf32>
    %25 = vector.shape_cast %24 : vector<1x3x288xf32> to vector<3x288xf32>
    %c24 = arith.constant 24 : index
    %c0_28 = arith.constant 0 : index
    %26 = vector.load %arg5[%c24, %c0_28] : memref<27x288xf32, #tpu.memory_space<vmem>>, vector<3x288xf32>
    tpu.vector_store %arg5[%c24, %c0_28], %25 {strides = array<i32>} : memref<27x288xf32, #tpu.memory_space<vmem>>, vector<3x288xf32>,
    %c0_29 = arith.constant 0 : index
    %c0_30 = arith.constant 0 : index
    %27 = vector.load %arg2[%c0_29, %c0_30] : memref<64x27xf32, #tpu.memory_space<vmem>>, vector<64x27xf32>
    %c0_31 = arith.constant 0 : index
    %c0_32 = arith.constant 0 : index
    %28 = vector.load %arg5[%c0_31, %c0_32] : memref<27x288xf32, #tpu.memory_space<vmem>>, vector<27x288xf32>
    %cst = arith.constant dense<0.000000e+00> : vector<64x288xf32>
    %29 = tpu.matmul %27, %28, %cst {dimension_numbers = #tpu.dot_dimension_numbers<[1], [0], [0], [1], [0, 0, 1, 1], [], []>} : vector<64x27xf32>, vector<27x288xf32>, vector<64x288xf32> -> vector<64x288xf32>
    %c0_33 = arith.constant 0 : index
    %c0_34 = arith.constant 0 : index
    %30 = vector.load %arg3[%c0_33, %c0_34] : memref<64x1xf32, #tpu.memory_space<vmem>>, vector<64x1xf32>
    %31 = vector.broadcast %30 : vector<64x1xf32> to vector<64x288xf32>
    %32 = arith.addf %29, %31 : vector<64x288xf32>
    %c0_35 = arith.constant 0 : index
    %c0_36 = arith.constant 0 : index
    %c0_37 = arith.constant 0 : index
    %33 = vector.load %arg4[%c0_35, %c0_36, %c0_37] : memref<1x64x288xf32, #tpu.memory_space<vmem>>, vector<1x64x288xf32>
    %34 = vector.shape_cast %33 : vector<1x64x288xf32> to vector<64x288xf32>
    %35 = vector.shape_cast %32 : vector<64x288xf32> to vector<1x64x288xf32>
    tpu.vector_store %arg4[%c0_35, %c0_36, %c0_37], %35 {strides = array<i32>} : memref<1x64x288xf32, #tpu.memory_space<vmem>>, vector<1x64x288xf32>,
    return
  }
  func.func @transform_0(%arg0: i32) -> (i32, i32, i32) {
    %c0_i32 = arith.constant 0 : i32
    %c0_i32_0 = arith.constant 0 : i32
    %c0_i32_1 = arith.constant 0 : i32
    return %arg0, %c0_i32, %c0_i32_0 : i32, i32, i32
  }
  func.func @transform_1(%arg0: i32) -> (i32, i32) {
    %c0_i32 = arith.constant 0 : i32
    %c0_i32_0 = arith.constant 0 : i32
    %c0_i32_1 = arith.constant 0 : i32
    return %c0_i32, %c0_i32_0 : i32, i32
  }
  func.func @transform_2(%arg0: i32) -> (i32, i32) {
    %c0_i32 = arith.constant 0 : i32
    %c0_i32_0 = arith.constant 0 : i32
    %c0_i32_1 = arith.constant 0 : i32
    return %c0_i32, %c0_i32_0 : i32, i32
  }
  func.func @transform_3(%arg0: i32) -> (i32, i32, i32) {
    %c0_i32 = arith.constant 0 : i32
    %c0_i32_0 = arith.constant 0 : i32
    %c0_i32_1 = arith.constant 0 : i32
    return %arg0, %c0_i32, %c0_i32_0 : i32, i32, i32
  }
}

</mosaic_0001>

<llo_original>
// kernel: conv2d_3x3_pallas.1
$region0: #{conv2d_3x3_pallas.1}
  #allocation0 [shape = 'u32[]', space=smem, size = 0x4, offset = 0x4, fixed_abs, tag = 'smem constant byte address 0x4 - core index']
  #allocation1 [shape = 'u32[144,128]{1,0:T(1,128)}', space=vmem, size = 0x12000, scoped, tag = 'internal scratch']
  #allocation2 [shape = 'f32[27,288]{1,0:T(8,128)}', space=vmem, size = 0xc000, scoped, tag = 'scratch operand']
  %s0 = inlined_call_operand.vmem [shape: f32[2,3,384], index: 0, kind: input, shape index: {}]
  %s1 = inlined_call_operand.vmem [shape: f32[64,27], index: 1, kind: input, shape index: {}]
  %s2 = inlined_call_operand.vmem [shape: f32[64,1], index: 2, kind: input, shape index: {}]
  %s3 = inlined_call_operand.vmem [shape: f32[2,64,288], index: 3, kind: output, shape index: {}]
  %s4 = sld [smem:[#allocation0]]
  $region45: #{conv2d_3x3_pallas.1} parent=0
    _
  %s6 = ssub.s32 1, %s4
  %s7 = scalar_select 0, %s6, %s4
  loop: start=0, step=1, limit=4
  $region2: #{conv2d_3x3_pallas.1} parent=0 // loop_pre_header
    _
  $region3: #{conv2d_3x3_pallas.1} parent=0 // loop_header
    %s9 = sphi 0, %s13
    %p10 = scmp.ge.s32.totalorder %s9, 4
    %s19 = sphi 0, %s21
    %s22 = sphi 0, %s19
    %s23 = sphi 0, %s22
    %s39 = sphi 0, %s23
    %s43 = sphi 0, %s43
    %s45 = sphi 0, %s43
    %s46 = sphi 0, %s45
    %s60 = sphi 0, %s46
    %s64 = sphi 0, %s64
    %s66 = sphi 0, %s64
    %s67 = sphi 0, %s66
    %s81 = sphi 0, %s67
    %s87 = sphi 0, %s89
    %s90 = sphi 0, %s87
    %s91 = sphi 0, %s90
    %s107 = sphi 0, %s91
  $region4: #{conv2d_3x3_pallas.1} parent=0 // loop_header_branch
    %12 = sbr.rel (%p10) target = $region8
  $region5: #{conv2d_3x3_pallas.1} parent=0 // loop_body
    %s14 = ssub.s32 %s9, 1
    %s15 = ssub.s32 %s9, 2
    %s16 = sadd.s32 %s9, 1
    %s17 = ssub.s32 %s9, %s16
    %p18 = scmp.eq.s32.totalorder %s17, 0
    %s20 = sadd.s32 %s19, 1
    %s21 = scalar_select %p18, %s19, %s20
    %p24 = pneg %p18
    %p25 = scmp.eq.s32.totalorder %s9, 1
    %p26 = por %p24, %p25
    %p27 = scmp.ne.s32.totalorder %s19, %s22
    %p28 = scmp.eq.s32.totalorder %s9, 0
    %p29 = por %p27, %p28
    %p30 = scmp.ne.s32.totalorder %s19, %s22
    %p31 = scmp.eq.s32.totalorder %s14, 1
    %p32 = por %p30, %p31
    %p33 = scmp.ne.s32.totalorder %s22, %s23
    %p34 = scmp.eq.s32.totalorder %s14, 0
    %p35 = por %p33, %p34
    %p36 = scmp.ne.s32.totalorder %s22, %s23
    %p37 = scmp.eq.s32.totalorder %s15, 1
    %p38 = por %p36, %p37
    %p40 = scmp.ne.s32.totalorder %s23, %s39
    %p41 = scmp.eq.s32.totalorder %s15, 0
    %p42 = por %p40, %p41
    %s44 = sadd.s32 %s43, 1
    %p47 = scmp.eq.s32.totalorder %s9, 1
    %p48 = scmp.ne.s32.totalorder %s43, %s45
    %p49 = scmp.eq.s32.totalorder %s9, 0
    %p50 = por %p48, %p49
    %p51 = scmp.ne.s32.totalorder %s43, %s45
    %p52 = scmp.eq.s32.totalorder %s14, 1
    %p53 = por %p51, %p52
    %p54 = scmp.ne.s32.totalorder %s45, %s46
    %p55 = scmp.eq.s32.totalorder %s14, 0
    %p56 = por %p54, %p55
    %p57 = scmp.ne.s32.totalorder %s45, %s46
    %p58 = scmp.eq.s32.totalorder %s15, 1
    %p59 = por %p57, %p58
    %p61 = scmp.ne.s32.totalorder %s46, %s60
    %p62 = scmp.eq.s32.totalorder %s15, 0
    %p63 = por %p61, %p62
    %s65 = sadd.s32 %s64, 1
    %p68 = scmp.eq.s32.totalorder %s9, 1
    %p69 = scmp.ne.s32.totalorder %s64, %s66
    %p70 = scmp.eq.s32.totalorder %s9, 0
    %p71 = por %p69, %p70
    %p72 = scmp.ne.s32.totalorder %s64, %s66
    %p73 = scmp.eq.s32.totalorder %s14, 1
    %p74 = por %p72, %p73
    %p75 = scmp.ne.s32.totalorder %s66, %s67
    %p76 = scmp.eq.s32.totalorder %s14, 0
    %p77 = por %p75, %p76
    %p78 = scmp.ne.s32.totalorder %s66, %s67
    %p79 = scmp.eq.s32.totalorder %s15, 1
    %p80 = por %p78, %p79
    %p82 = scmp.ne.s32.totalorder %s67, %s81
    %p83 = scmp.eq.s32.totalorder %s15, 0
    %p84 = por %p82, %p83
    %s85 = ssub.s32 %s9, %s16
    %p86 = scmp.eq.s32.totalorder %s85, 0
    %s88 = sadd.s32 %s87, 1
    %s89 = scalar_select %p86, %s87, %s88
    %p92 = pneg %p86
    %p93 = scmp.eq.s32.totalorder %s9, 1
    %p94 = por %p92, %p93
    %p95 = scmp.ne.s32.totalorder %s87, %s90
    %p96 = scmp.eq.s32.totalorder %s9, 0
    %p97 = por %p95, %p96
    %p98 = scmp.ne.s32.totalorder %s87, %s90
    %p99 = scmp.eq.s32.totalorder %s14, 1
    %p100 = por %p98, %p99
    %p101 = scmp.ne.s32.totalorder %s90, %s91
    %p102 = scmp.eq.s32.totalorder %s14, 0
    %p103 = por %p101, %p102
    %p104 = scmp.ne.s32.totalorder %s90, %s91
    %p105 = scmp.eq.s32.totalorder %s15, 1
    %p106 = por %p104, %p105
    %p108 = scmp.ne.s32.totalorder %s91, %s107
    %p109 = scmp.eq.s32.totalorder %s15, 0
    %p110 = por %p108, %p109
    %p111 = scmp.le.s32.totalorder 1, %s9
    %p112 = scmp.lt.s32.totalorder %s9, 3
    %p113 = pnand %p111, %p112
    %p114 = pneg %p113
    // Predicated region
    $region9: #{conv2d_3x3_pallas.1} parent=5 // pred_check
      _
    $region10: #{conv2d_3x3_pallas.1} parent=5 // pred_check_branch
      %116 = sbr.rel (%p113) target = $region12
    $region11: #{conv2d_3x3_pallas.1} parent=5 // pred_region
      %s117 = ssub.s32 %s9, 1
      // Predicated region
      $region13: #{conv2d_3x3_pallas.1} parent=11 // pred_check
        %p118 = pneg %p56
      $region14: #{conv2d_3x3_pallas.1} parent=11 // pred_check_branch
        %120 = sbr.rel (%p118) target = $region16
      $region15: #{conv2d_3x3_pallas.1} parent=11 // pred_region
        _
      $region16: #{conv2d_3x3_pallas.1} parent=11 // pred_fallthru
        _
      // Predicated region
      $region17: #{conv2d_3x3_pallas.1} parent=11 // pred_check
        %p121 = pneg %p77
      $region18: #{conv2d_3x3_pallas.1} parent=11 // pred_check_branch
        %123 = sbr.rel (%p121) target = $region20
      $region19: #{conv2d_3x3_pallas.1} parent=11 // pred_region
        _
      $region20: #{conv2d_3x3_pallas.1} parent=11 // pred_fallthru
        _
    $region12: #{conv2d_3x3_pallas.1} parent=5 // pred_fallthru
      _
    %p124 = scmp.lt.s32.totalorder %s9, 2
    // Predicated region
    $region21: #{conv2d_3x3_pallas.1} parent=5 // pred_check
      %p125 = pneg %p124
    $region22: #{conv2d_3x3_pallas.1} parent=5 // pred_check_branch
      %127 = sbr.rel (%p125) target = $region24
    $region23: #{conv2d_3x3_pallas.1} parent=5 // pred_region
      // Predicated region
      $region25: #{conv2d_3x3_pallas.1} parent=23 // pred_check
        %p128 = pneg %p29
      $region26: #{conv2d_3x3_pallas.1} parent=23 // pred_check_branch
        %130 = sbr.rel (%p128) target = $region28
      $region27: #{conv2d_3x3_pallas.1} parent=23 // pred_region
        %p131 = scmp.lt.s32.totalorder %s9, 1
        %s132 = scalar_select %p131, %s9, 1
        %s133 = smul.addr %s132, 3
        %s134 = smul.addr %s133, 4
        %s135 = scalar_lea.vmem %s0, %s134
      $region28: #{conv2d_3x3_pallas.1} parent=23 // pred_fallthru
        _
    $region24: #{conv2d_3x3_pallas.1} parent=5 // pred_fallthru
      _
    %p136 = scmp.le.s32.totalorder 1, %s9
    %p137 = scmp.lt.s32.totalorder %s9, 3
    %p138 = pnand %p136, %p137
    %p139 = pneg %p138
    // Predicated region
    $region29: #{conv2d_3x3_pallas.1} parent=5 // pred_check
      _
    $region30: #{conv2d_3x3_pallas.1} parent=5 // pred_check_branch
      %141 = sbr.rel (%p138) target = $region32
    $region31: #{conv2d_3x3_pallas.1} parent=5 // pred_region
      %s142 = ssub.s32 %s9, 1
      %p143 = scmp.lt.s32.totalorder %s14, 1
      %s144 = scalar_select %p143, %s14, 1
      %s145 = smul.addr %s144, 3
      %s146 = smul.addr %s145, 4
      %s147 = scalar_lea.vmem %s0, %s146
      %p148 = pneg %p35
      %p149 = pneg %p32
      %p150 = pneg %p56
      %p151 = pneg %p53
      %p152 = pneg %p77
      %p153 = pneg %p74
      %p154 = pneg %p103
      %p155 = pneg %p100
      %p156 = scmp.lt.s32.totalorder %s14, 1
      %s157 = scalar_select %p156, %s14, 1
      %s158 = smul.addr %s157, 24
      %s159 = smul.addr %s158, 8
      %s160 = scalar_lea.vmem %s3, %s159
      %p161 = scmp.lt.s32.totalorder %s14, 1
      %s162 = scalar_select %p161, %s14, 1
      %s163 = smul.addr %s162, 3
      %s164 = smul.addr %s163, 4
      %s165 = scalar_lea.vmem %s0, %s164
      %p166 = scmp.lt.s32.totalorder %s14, 1
      %s167 = scalar_select %p166, %s14, 1
      %s168 = smul.addr %s167, 24
      %s169 = smul.addr %s168, 8
      %s170 = scalar_lea.vmem %s3, %s169
      %v171 = vld [vmem:[%s165] sm:$0x77]
      %v172 = vld [vmem:[%s165 + $0x8] sm:$0x7]
      %v174 = vcombine.high %v171, %v171
      %176 = vst [vmem:[#allocation2] sm:$0x7] %v171
      %177 = vst [vmem:[#allocation2 + $0x8] sm:$0x7] %v174
      %vm178 = vcmask 256000
      %179 = vst.msk [vmem:[#allocation2 + $0x10] sm:$0x7] %vm178, %v172
      %v180 = vld [vmem:[%s165] sm:$0x77]
      %v181 = vld [vmem:[%s165 + $0x8] sm:$0x7]
      %v184 = vcombine.high %v180, %v180
      %v185 = vrot.slane %v180, 5
      %v186 = vrot.slane %v184, 5
      %v187 = vrot.slane %v181, 5
      %188 = vrot.lane.b32.xlu0 %v185, 127
      %v189 = vpop.permute.xlu0 %188
      %190 = vrot.lane.b32.xlu0 %v186, 127
      %v191 = vpop.permute.xlu0 %190
      %192 = vrot.lane.b32.xlu0 %v187, 127
      %v193 = vpop.permute.xlu0 %192
      %vm194 = vcmask 1039360
      %v195 = vsel %vm194, %v189, %v191
      %v196 = vsel %vm194, %v191, %v193
      %200 = vst [vmem:[#allocation2] sm:$0x38] %v195
      %201 = vst [vmem:[#allocation2 + $0x8] sm:$0x38] %v196
      %vm202 = vcmask 259075
      %203 = vst.msk [vmem:[#allocation2 + $0x10] sm:$0x38] %vm202, %v193
      %v204 = vld [vmem:[%s165] sm:$0x77]
      %v205 = vld [vmem:[%s165 + $0x8] sm:$0x7]
      %v208 = vcombine.high %v204, %v204
      %v209 = vrot.slane %v204, 2
      %v210 = vrot.slane %v208, 2
      %v211 = vrot.slane %v205, 2
      %212 = vrot.lane.b32.xlu0 %v209, 126
      %v213 = vpop.permute.xlu0 %212
      %214 = vrot.lane.b32.xlu0 %v210, 126
      %v215 = vpop.permute.xlu0 %214
      %216 = vrot.lane.b32.xlu0 %v211, 126
      %v217 = vpop.permute.xlu0 %216
      %vm218 = vcmask 1031168
      %v219 = vsel %vm218, %v213, %v215
      %v220 = vsel %vm218, %v215, %v217
      %224 = vst [vmem:[#allocation2] sm:$0xc0] %v219
      %225 = vst [vmem:[#allocation2 + $0x8] sm:$0xc0] %v220
      %vm226 = vcmask 261126
      %227 = vst.msk [vmem:[#allocation2 + $0x10] sm:$0xc0] %vm226, %v217
      %228 = vst [vmem:[#allocation2 + $0x18] sm:$0x1] %v219
      %229 = vst [vmem:[#allocation2 + $0x20] sm:$0x1] %v220
      %vm230 = vcmask 253952
      %231 = vst.msk [vmem:[#allocation2 + $0x28] sm:$0x1] %vm230, %v217
      %v232 = vld [vmem:[%s165] sm:$0x77]
      %v233 = vld [vmem:[%s165 + $0x8] sm:$0x7]
      %v236 = vcombine.high %v232, %v232
      %v237 = vrot.slane %v232, 7
      %v238 = vrot.slane %v236, 7
      %v239 = vrot.slane %v233, 7
      %240 = vrot.lane.b32.xlu0 %v237, 110
      %v241 = vpop.permute.xlu0 %240
      %242 = vrot.lane.b32.xlu0 %v238, 110
      %v243 = vpop.permute.xlu0 %242
      %244 = vrot.lane.b32.xlu0 %v239, 110
      %v245 = vpop.permute.xlu0 %244
      %vm246 = vcmask 900096
      %v247 = vsel %vm246, %v241, %v243
      %v248 = vsel %vm246, %v243, %v245
      %252 = vst [vmem:[#allocation2 + $0x18] sm:$0xe] %v247
      %253 = vst [vmem:[#allocation2 + $0x20] sm:$0xe] %v248
      %vm254 = vcmask 257025
      %255 = vst.msk [vmem:[#allocation2 + $0x28] sm:$0xe] %vm254, %v245
      %v256 = vld [vmem:[%s165] sm:$0x77]
      %v257 = vld [vmem:[%s165 + $0x8] sm:$0x7]
      %v260 = vcombine.low %v256, %v256
      %v261 = vcombine.low %v257, %v257
      %262 = vrot.lane.b32.xlu0 %v260, 109
      %v263 = vpop.permute.xlu0 %262
      %264 = vrot.lane.b32.xlu0 %v256, 109
      %v265 = vpop.permute.xlu0 %264
      %266 = vrot.lane.b32.xlu0 %v261, 109
      %v267 = vpop.permute.xlu0 %266
      %vm268 = vcmask 891904
      %v269 = vsel %vm268, %v263, %v265
      %v270 = vsel %vm268, %v265, %v267
      %274 = vst [vmem:[#allocation2 + $0x18] sm:$0x70] %v269
      %275 = vst [vmem:[#allocation2 + $0x20] sm:$0x70] %v270
      %vm276 = vcmask 260100
      %277 = vst.msk [vmem:[#allocation2 + $0x28] sm:$0x70] %vm276, %v267
      %v278 = vld [vmem:[%s165] sm:$0x77]
      %v279 = vld [vmem:[%s165 + $0x8] sm:$0x7]
      %v282 = vcombine.high %v278, %v278
      %v283 = vrot.slane %v278, 1
      %v284 = vrot.slane %v282, 1
      %v285 = vrot.slane %v279, 1
      %286 = vrot.lane.b32.xlu0 %v283, 108
      %v287 = vpop.permute.xlu0 %286
      %288 = vrot.lane.b32.xlu0 %v284, 108
      %v289 = vpop.permute.xlu0 %288
      %290 = vrot.lane.b32.xlu0 %v285, 108
      %v291 = vpop.permute.xlu0 %290
      %vm292 = vcmask 883712
      %v293 = vsel %vm292, %v287, %v289
      %v294 = vsel %vm292, %v289, %v291
      %298 = vst [vmem:[#allocation2 + $0x18] sm:$0x80] %v293
      %299 = vst [vmem:[#allocation2 + $0x20] sm:$0x80] %v294
      %vm300 = vcmask 261127
      %301 = vst.msk [vmem:[#allocation2 + $0x28] sm:$0x80] %vm300, %v291
      %302 = vst [vmem:[#allocation2 + $0x30] sm:$0x3] %v293
      %303 = vst [vmem:[#allocation2 + $0x38] sm:$0x3] %v294
      %vm304 = vcmask 254976
      %305 = vst.msk [vmem:[#allocation2 + $0x40] sm:$0x3] %vm304, %v291
      %v306 = vld [vmem:[%s165] sm:$0x77]
      %v307 = vld [vmem:[%s165 + $0x8] sm:$0x7]
      %v310 = vcombine.high %v306, %v306
      %v311 = vrot.slane %v306, 6
      %v312 = vrot.slane %v310, 6
      %v313 = vrot.slane %v307, 6
      %314 = vrot.lane.b32.xlu0 %v311, 92
      %v315 = vpop.permute.xlu0 %314
      %316 = vrot.lane.b32.xlu0 %v312, 92
      %v317 = vpop.permute.xlu0 %316
      %318 = vrot.lane.b32.xlu0 %v313, 92
      %v319 = vpop.permute.xlu0 %318
      %vm320 = vcmask 752640
      %v321 = vsel %vm320, %v315, %v317
      %v322 = vsel %vm320, %v317, %v319
      %326 = vst [vmem:[#allocation2 + $0x30] sm:$0x1c] %v321
      %327 = vst [vmem:[#allocation2 + $0x38] sm:$0x1c] %v322
      %vm328 = vcmask 258050
      %329 = vst.msk [vmem:[#allocation2 + $0x40] sm:$0x1c] %vm328, %v319
      %v330 = vld [vmem:[%s165] sm:$0x77]
      %v331 = vld [vmem:[%s165 + $0x8] sm:$0x7]
      %v334 = vcombine.high %v330, %v330
      %v335 = vrot.slane %v330, 3
      %v336 = vrot.slane %v334, 3
      %v337 = vrot.slane %v331, 3
      %338 = vrot.lane.b32.xlu0 %v335, 91
      %v339 = vpop.permute.xlu0 %338
      %340 = vrot.lane.b32.xlu0 %v336, 91
      %v341 = vpop.permute.xlu0 %340
      %342 = vrot.lane.b32.xlu0 %v337, 91
      %v343 = vpop.permute.xlu0 %342
      %vm344 = vcmask 744448
      %v345 = vsel %vm344, %v339, %v341
      %v346 = vsel %vm344, %v341, %v343
      %350 = vst [vmem:[#allocation2 + $0x30] sm:$0xe0] %v345
      %351 = vst [vmem:[#allocation2 + $0x38] sm:$0xe0] %v346
      %vm352 = vcmask 261125
      %353 = vst.msk [vmem:[#allocation2 + $0x40] sm:$0xe0] %vm352, %v343
      %v354 = vld [vmem:[%s165] sm:$0x77]
      %v355 = vld [vmem:[%s165 + $0x8] sm:$0x7]
      %v358 = vcombine.high %v354, %v354
      %359 = vrot.lane.b32.xlu0 %v354, 90
      %v360 = vpop.permute.xlu0 %359
      %361 = vrot.lane.b32.xlu0 %v358, 90
      %v362 = vpop.permute.xlu0 %361
      %363 = vrot.lane.b32.xlu0 %v355, 90
      %v364 = vpop.permute.xlu0 %363
      %vm365 = vcmask 736256
      %v366 = vsel %vm365, %v360, %v362
      %v367 = vsel %vm365, %v362, %v364
      %371 = vst [vmem:[#allocation2 + $0x48] sm:$0x7] %v366
      %372 = vst [vmem:[#allocation2 + $0x50] sm:$0x7] %v367
      %373 = vst.msk [vmem:[#allocation2 + $0x58] sm:$0x7] %vm178, %v364
      %v374 = vld [vmem:[%s1] sm:$0xff]
      %v375 = vld [vmem:[%s1 + $0x8] sm:$0xff]
      %v376 = vld [vmem:[%s1 + $0x10] sm:$0xff]
      %v377 = vld [vmem:[%s1 + $0x18] sm:$0xff]
      %v378 = vld [vmem:[%s1 + $0x20] sm:$0xff]
      %v379 = vld [vmem:[%s1 + $0x28] sm:$0xff]
      %v380 = vld [vmem:[%s1 + $0x30] sm:$0xff]
      %v381 = vld [vmem:[%s1 + $0x38] sm:$0xff]
      %v382 = vld [vmem:[#allocation2] sm:$0xff]
      %v383 = vld [vmem:[#allocation2 + $0x8] sm:$0xff]
      %v384 = vld [vmem:[#allocation2 + $0x10] sm:$0xff]
      %v385 = vld [vmem:[#allocation2 + $0x18] sm:$0xff]
      %v386 = vld [vmem:[#allocation2 + $0x20] sm:$0xff]
      %v387 = vld [vmem:[#allocation2 + $0x28] sm:$0xff]
      %v388 = vld [vmem:[#allocation2 + $0x30] sm:$0xff]
      %v389 = vld [vmem:[#allocation2 + $0x38] sm:$0xff]
      %v390 = vld [vmem:[#allocation2 + $0x40] sm:$0xff]
      %v391 = vld [vmem:[#allocation2 + $0x48] sm:$0x7]
      %v392 = vld [vmem:[#allocation2 + $0x50] sm:$0x7]
      %v393 = vld [vmem:[#allocation2 + $0x58] sm:$0x7]
      %v394 = vld [vmem:[%s2] sm:$0xff]
      %v395 = vld [vmem:[%s2 + $0x8] sm:$0xff]
      %v396 = vld [vmem:[%s2 + $0x10] sm:$0xff]
      %v397 = vld [vmem:[%s2 + $0x18] sm:$0xff]
      %v398 = vld [vmem:[%s2 + $0x20] sm:$0xff]
      %v399 = vld [vmem:[%s2 + $0x28] sm:$0xff]
      %v400 = vld [vmem:[%s2 + $0x30] sm:$0xff]
      %v401 = vld [vmem:[%s2 + $0x38] sm:$0xff]
      %403 = vset.pattern.permute.xlu0 0
      %404 = vperm.xlu0 %403, %v394
      %v405 = vpop.permute.xlu0 %404
      %408 = vset.pattern.permute.xlu0 0
      %409 = vperm.xlu0 %408, %v395
      %v410 = vpop.permute.xlu0 %409
      %413 = vset.pattern.permute.xlu0 0
      %414 = vperm.xlu0 %413, %v396
      %v415 = vpop.permute.xlu0 %414
      %418 = vset.pattern.permute.xlu0 0
      %419 = vperm.xlu0 %418, %v397
      %v420 = vpop.permute.xlu0 %419
      %423 = vset.pattern.permute.xlu0 0
      %424 = vperm.xlu0 %423, %v398
      %v425 = vpop.permute.xlu0 %424
      %428 = vset.pattern.permute.xlu0 0
      %429 = vperm.xlu0 %428, %v399
      %v430 = vpop.permute.xlu0 %429
      %433 = vset.pattern.permute.xlu0 0
      %434 = vperm.xlu0 %433, %v400
      %v435 = vpop.permute.xlu0 %434
      %438 = vset.pattern.permute.xlu0 0
      %439 = vperm.xlu0 %438, %v401
      %v440 = vpop.permute.xlu0 %439
      %vm442 = vcmask 220160
      %v444 = vsel %vm442, %v374, 0
      %v447 = vsel %vm442, %v375, 0
      %v450 = vsel %vm442, %v376, 0
      %v453 = vsel %vm442, %v377, 0
      %v456 = vsel %vm442, %v378, 0
      %v459 = vsel %vm442, %v379, 0
      %v462 = vsel %vm442, %v380, 0
      %v465 = vsel %vm442, %v381, 0
      %vm467 = vcmask 1042432
      %v469 = vsel %vm467, %v391, 0
      %v472 = vsel %vm467, %v392, 0
      %v475 = vsel %vm467, %v393, 0
      %477 = vmatprep.subr.mxu0 %v383
      %478 = vmatpush1.msra.mxu0 %v382
      %479 = vmatprep.subr.mxu0 %v386
      %480 = vmatpush1.msra.mxu0 %v385
      %481 = vmatprep.subr.mxu0 %v389
      %482 = vmatpush1.msra.mxu0 %v388
      %483 = vmatprep.subr.mxu0 %v472
      %484 = vmatpush1.msra.mxu0 %v469
      %485 = vmatprep.subr.mxu0 0.0
      %486 = vmatpush1.msra.mxu0 0.0
      %487 = vmatprep.subr.mxu0 0.0
      %488 = vmatpush1.msra.mxu0 0.0
      %489 = vmatprep.subr.mxu0 0.0
      %490 = vmatpush1.msra.mxu0 0.0
      %491 = vmatprep.subr.mxu0 0.0
      %492 = vmatpush1.msra.mxu0 0.0
      %493 = vmatprep.subr.mxu0 0.0
      %494 = vmatpush1.msra.mxu0 0.0
      %495 = vmatprep.subr.mxu0 0.0
      %496 = vmatpush1.msra.mxu0 0.0
      %497 = vmatprep.subr.mxu0 0.0
      %498 = vmatpush1.msra.mxu0 0.0
      %499 = vmatprep.subr.mxu0 0.0
      %500 = vmatpush1.msra.mxu0 0.0
      %501 = vmatprep.subr.mxu0 0.0
      %502 = vmatpush1.msra.mxu0 0.0
      %503 = vmatprep.subr.mxu0 0.0
      %504 = vmatpush1.msra.mxu0 0.0
      %505 = vmatprep.subr.mxu0 0.0
      %506 = vmatpush1.msra.mxu0 0.0
      %507 = vmatprep.subr.mxu0 0.0
      %508 = vmatpush1.msra.mxu0 0.0
      %509 = vmatprep.subr.mxu0 0.0
      %510 = vmatpush1.msra.mxu0 0.0
      %511 = vmatprep.subr.mxu0 0.0
      %512 = vmatpush1.msra.mxu0 0.0
      %513 = vmatprep.subr.mxu0 0.0
      %514 = vmatpush1.msra.mxu0 0.0
      %515 = vmatprep.subr.mxu0 0.0
      %516 = vmatpush1.msra.mxu0 0.0
      %517 = vmatprep.subr.mxu0 0.0
      %518 = vmatpush1.msra.mxu0 0.0
      %519 = vmatprep.subr.mxu0 0.0
      %520 = vmatpush1.msra.mxu0 0.0
      %521 = vmatprep.subr.mxu0 0.0
      %522 = vmatpush1.msra.mxu0 0.0
      %523 = vmatprep.subr.mxu0 0.0
      %524 = vmatpush1.msra.mxu0 0.0
      %525 = vmatprep.subr.mxu0 0.0
      %526 = vmatpush1.msra.mxu0 0.0
      %527 = vmatprep.subr.mxu0 0.0
      %528 = vmatpush1.msra.mxu0 0.0
      %529 = vmatprep.subr.mxu0 0.0
      %530 = vmatpush1.msra.mxu0 0.0
      %531 = vmatprep.subr.mxu0 0.0
      %532 = vmatpush1.msra.mxu0 0.0
      %533 = vmatprep.subr.mxu0 0.0
      %534 = vmatpush1.msra.mxu0 0.0
      %535 = vmatprep.subr.mxu0 0.0
      %536 = vmatpush1.msra.mxu0 0.0
      %537 = vmatprep.subr.mxu0 0.0
      %538 = vmatpush1.msra.mxu0 0.0
      %539 = vmatprep.subr.mxu0 0.0
      %540 = vmatpush1.msra.mxu0 0.0
      %541 = vmatprep.mubr.f32.mxu0 0.0
      %542 = vmatmul.mubr.f32.gmra.mrb[0].mxu0 %v444
      %v543 = vpop.f32.mrb[0].mxu0
      %v544 = vadd.f32 %v405, %v543
      %v545 = vpop.f32.mrb[0].mxu0
      %v546 = vadd.f32 %v405, %v545
      %547 = vmatprep.mubr.f32.mxu0 0.0
      %548 = vmatmul.mubr.f32.gmra.mrb[0].mxu0 %v447
      %v549 = vpop.f32.mrb[0].mxu0
      %v550 = vadd.f32 %v410, %v549
      %v551 = vpop.f32.mrb[0].mxu0
      %v552 = vadd.f32 %v410, %v551
      %553 = vmatprep.mubr.f32.mxu0 0.0
      %554 = vmatmul.mubr.f32.gmra.mrb[0].mxu0 %v450
      %v555 = vpop.f32.mrb[0].mxu0
      %v556 = vadd.f32 %v415, %v555
      %v557 = vpop.f32.mrb[0].mxu0
      %v558 = vadd.f32 %v415, %v557
      %559 = vmatprep.mubr.f32.mxu0 0.0
      %560 = vmatmul.mubr.f32.gmra.mrb[0].mxu0 %v453
      %v561 = vpop.f32.mrb[0].mxu0
      %v562 = vadd.f32 %v420, %v561
      %v563 = vpop.f32.mrb[0].mxu0
      %v564 = vadd.f32 %v420, %v563
      %565 = vmatprep.mubr.f32.mxu0 0.0
      %566 = vmatmul.mubr.f32.gmra.mrb[0].mxu0 %v456
      %v567 = vpop.f32.mrb[0].mxu0
      %v568 = vadd.f32 %v425, %v567
      %v569 = vpop.f32.mrb[0].mxu0
      %v570 = vadd.f32 %v425, %v569
      %571 = vmatprep.mubr.f32.mxu0 0.0
      %572 = vmatmul.mubr.f32.gmra.mrb[0].mxu0 %v459
      %v573 = vpop.f32.mrb[0].mxu0
      %v574 = vadd.f32 %v430, %v573
      %v575 = vpop.f32.mrb[0].mxu0
      %v576 = vadd.f32 %v430, %v575
      %577 = vmatprep.mubr.f32.mxu0 0.0
      %578 = vmatmul.mubr.f32.gmra.mrb[0].mxu0 %v462
      %v579 = vpop.f32.mrb[0].mxu0
      %v580 = vadd.f32 %v435, %v579
      %v581 = vpop.f32.mrb[0].mxu0
      %v582 = vadd.f32 %v435, %v581
      %583 = vmatprep.mubr.f32.mxu0 0.0
      %584 = vmatmul.mubr.f32.gmra.mrb[0].mxu0 %v465
      %v585 = vpop.f32.mrb[0].mxu0
      %v586 = vadd.f32 %v440, %v585
      %v587 = vpop.f32.mrb[0].mxu0
      %v588 = vadd.f32 %v440, %v587
      %589 = vdwg.mxu0
      %590 = vmatprep.subr.mxu0 0.0
      %591 = vmatpush1.msra.mxu0 %v384
      %592 = vmatprep.subr.mxu0 0.0
      %593 = vmatpush1.msra.mxu0 %v387
      %594 = vmatprep.subr.mxu0 0.0
      %595 = vmatpush1.msra.mxu0 %v390
      %596 = vmatprep.subr.mxu0 0.0
      %597 = vmatpush1.msra.mxu0 %v475
      %598 = vmatprep.subr.mxu0 0.0
      %599 = vmatpush1.msra.mxu0 0.0
      %600 = vmatprep.subr.mxu0 0.0
      %601 = vmatpush1.msra.mxu0 0.0
      %602 = vmatprep.subr.mxu0 0.0
      %603 = vmatpush1.msra.mxu0 0.0
      %604 = vmatprep.subr.mxu0 0.0
      %605 = vmatpush1.msra.mxu0 0.0
      %606 = vmatprep.subr.mxu0 0.0
      %607 = vmatpush1.msra.mxu0 0.0
      %608 = vmatprep.subr.mxu0 0.0
      %609 = vmatpush1.msra.mxu0 0.0
      %610 = vmatprep.subr.mxu0 0.0
      %611 = vmatpush1.msra.mxu0 0.0
      %612 = vmatprep.subr.mxu0 0.0
      %613 = vmatpush1.msra.mxu0 0.0
      %614 = vmatprep.subr.mxu0 0.0
      %615 = vmatpush1.msra.mxu0 0.0
      %616 = vmatprep.subr.mxu0 0.0
      %617 = vmatpush1.msra.mxu0 0.0
      %618 = vmatprep.subr.mxu0 0.0
      %619 = vmatpush1.msra.mxu0 0.0
      %620 = vmatprep.subr.mxu0 0.0
      %621 = vmatpush1.msra.mxu0 0.0
      %622 = vmatprep.subr.mxu0 0.0
      %623 = vmatpush1.msra.mxu0 0.0
      %624 = vmatprep.subr.mxu0 0.0
      %625 = vmatpush1.msra.mxu0 0.0
      %626 = vmatprep.subr.mxu0 0.0
      %627 = vmatpush1.msra.mxu0 0.0
      %628 = vmatprep.subr.mxu0 0.0
      %629 = vmatpush1.msra.mxu0 0.0
      %630 = vmatprep.subr.mxu0 0.0
      %631 = vmatpush1.msra.mxu0 0.0
      %632 = vmatprep.subr.mxu0 0.0
      %633 = vmatpush1.msra.mxu0 0.0
      %634 = vmatprep.subr.mxu0 0.0
      %635 = vmatpush1.msra.mxu0 0.0
      %636 = vmatprep.subr.mxu0 0.0
      %637 = vmatpush1.msra.mxu0 0.0
      %638 = vmatprep.subr.mxu0 0.0
      %639 = vmatpush1.msra.mxu0 0.0
      %640 = vmatprep.subr.mxu0 0.0
      %641 = vmatpush1.msra.mxu0 0.0
      %642 = vmatprep.subr.mxu0 0.0
      %643 = vmatpush1.msra.mxu0 0.0
      %644 = vmatprep.subr.mxu0 0.0
      %645 = vmatpush1.msra.mxu0 0.0
      %646 = vmatprep.subr.mxu0 0.0
      %647 = vmatpush1.msra.mxu0 0.0
      %648 = vmatprep.subr.mxu0 0.0
      %649 = vmatpush1.msra.mxu0 0.0
      %650 = vmatprep.subr.mxu0 0.0
      %651 = vmatpush1.msra.mxu0 0.0
      %652 = vmatprep.subr.mxu0 0.0
      %653 = vmatpush1.msra.mxu0 0.0
      %654 = vmatprep.mubr.f32.mxu0 0.0
      %655 = vmatmul.mubr.f32.gmra.mrb[0].mxu0 %v444
      %v656 = vpop.f32.mrb[0].mxu0
      %v657 = vadd.f32 %v405, %v656
      %v658 = vpop.f32.mrb[0].mxu0
      %659 = vmatprep.mubr.f32.mxu0 0.0
      %660 = vmatmul.mubr.f32.gmra.mrb[0].mxu0 %v447
      %v661 = vpop.f32.mrb[0].mxu0
      %v662 = vadd.f32 %v410, %v661
      %v663 = vpop.f32.mrb[0].mxu0
      %664 = vmatprep.mubr.f32.mxu0 0.0
      %665 = vmatmul.mubr.f32.gmra.mrb[0].mxu0 %v450
      %v666 = vpop.f32.mrb[0].mxu0
      %v667 = vadd.f32 %v415, %v666
      %v668 = vpop.f32.mrb[0].mxu0
      %669 = vmatprep.mubr.f32.mxu0 0.0
      %670 = vmatmul.mubr.f32.gmra.mrb[0].mxu0 %v453
      %v671 = vpop.f32.mrb[0].mxu0
      %v672 = vadd.f32 %v420, %v671
      %v673 = vpop.f32.mrb[0].mxu0
      %674 = vmatprep.mubr.f32.mxu0 0.0
      %675 = vmatmul.mubr.f32.gmra.mrb[0].mxu0 %v456
      %v676 = vpop.f32.mrb[0].mxu0
      %v677 = vadd.f32 %v425, %v676
      %v678 = vpop.f32.mrb[0].mxu0
      %679 = vmatprep.mubr.f32.mxu0 0.0
      %680 = vmatmul.mubr.f32.gmra.mrb[0].mxu0 %v459
      %v681 = vpop.f32.mrb[0].mxu0
      %v682 = vadd.f32 %v430, %v681
      %v683 = vpop.f32.mrb[0].mxu0
      %684 = vmatprep.mubr.f32.mxu0 0.0
      %685 = vmatmul.mubr.f32.gmra.mrb[0].mxu0 %v462
      %v686 = vpop.f32.mrb[0].mxu0
      %v687 = vadd.f32 %v435, %v686
      %v688 = vpop.f32.mrb[0].mxu0
      %689 = vmatprep.mubr.f32.mxu0 0.0
      %690 = vmatmul.mubr.f32.gmra.mrb[0].mxu0 %v465
      %v691 = vpop.f32.mrb[0].mxu0
      %v692 = vadd.f32 %v440, %v691
      %v693 = vpop.f32.mrb[0].mxu0
      %694 = vdwg.mxu0
      %695 = vst [vmem:[%s170] sm:$0xff] %v544
      %696 = vst [vmem:[%s170 + $0x8] sm:$0xff] %v546
      %vm697 = vcmask 261120
      %698 = vst.msk [vmem:[%s170 + $0x10] sm:$0xff] %vm697, %v657
      %699 = vst [vmem:[%s170 + $0x18] sm:$0xff] %v550
      %700 = vst [vmem:[%s170 + $0x20] sm:$0xff] %v552
      %701 = vst.msk [vmem:[%s170 + $0x28] sm:$0xff] %vm697, %v662
      %702 = vst [vmem:[%s170 + $0x30] sm:$0xff] %v556
      %703 = vst [vmem:[%s170 + $0x38] sm:$0xff] %v558
      %704 = vst.msk [vmem:[%s170 + $0x40] sm:$0xff] %vm697, %v667
      %705 = vst [vmem:[%s170 + $0x48] sm:$0xff] %v562
      %706 = vst [vmem:[%s170 + $0x50] sm:$0xff] %v564
      %707 = vst.msk [vmem:[%s170 + $0x58] sm:$0xff] %vm697, %v672
      %708 = vst [vmem:[%s170 + $0x60] sm:$0xff] %v568
      %709 = vst [vmem:[%s170 + $0x68] sm:$0xff] %v570
      %710 = vst.msk [vmem:[%s170 + $0x70] sm:$0xff] %vm697, %v677
      %711 = vst [vmem:[%s170 + $0x78] sm:$0xff] %v574
      %712 = vst [vmem:[%s170 + $0x80] sm:$0xff] %v576
      %713 = vst.msk [vmem:[%s170 + $0x88] sm:$0xff] %vm697, %v682
      %714 = vst [vmem:[%s170 + $0x90] sm:$0xff] %v580
      %715 = vst [vmem:[%s170 + $0x98] sm:$0xff] %v582
      %716 = vst.msk [vmem:[%s170 + $0xa0] sm:$0xff] %vm697, %v687
      %717 = vst [vmem:[%s170 + $0xa8] sm:$0xff] %v586
      %718 = vst [vmem:[%s170 + $0xb0] sm:$0xff] %v588
      %719 = vst.msk [vmem:[%s170 + $0xb8] sm:$0xff] %vm697, %v692
      %p720 = scmp.lt.s32.totalorder %s14, 1
      %s721 = scalar_select %p720, %s14, 1
      %s722 = smul.addr %s721, 24
      %s723 = smul.addr %s722, 8
      %s724 = scalar_lea.vmem %s3, %s723
      // Predicated region
      $region33: #{conv2d_3x3_pallas.1} parent=31 // pred_check
        %p725 = pneg %p100
      $region34: #{conv2d_3x3_pallas.1} parent=31 // pred_check_branch
        %727 = sbr.rel (%p725) target = $region36
      $region35: #{conv2d_3x3_pallas.1} parent=31 // pred_region
        _
      $region36: #{conv2d_3x3_pallas.1} parent=31 // pred_fallthru
        _
    $region32: #{conv2d_3x3_pallas.1} parent=5 // pred_fallthru
      _
    %p728 = scmp.le.s32.totalorder 2, %s9
    // Predicated region
    $region37: #{conv2d_3x3_pallas.1} parent=5 // pred_check
      %p729 = pneg %p728
    $region38: #{conv2d_3x3_pallas.1} parent=5 // pred_check_branch
      %731 = sbr.rel (%p729) target = $region40
    $region39: #{conv2d_3x3_pallas.1} parent=5 // pred_region
      %s732 = ssub.s32 %s9, 2
      // Predicated region
      $region41: #{conv2d_3x3_pallas.1} parent=39 // pred_check
        %p733 = pneg %p106
      $region42: #{conv2d_3x3_pallas.1} parent=39 // pred_check_branch
        %735 = sbr.rel (%p733) target = $region44
      $region43: #{conv2d_3x3_pallas.1} parent=39 // pred_region
        %p736 = scmp.lt.s32.totalorder %s15, 1
        %s737 = scalar_select %p736, %s15, 1
        %s738 = smul.addr %s737, 24
        %s739 = smul.addr %s738, 8
        %s740 = scalar_lea.vmem %s3, %s739
      $region44: #{conv2d_3x3_pallas.1} parent=39 // pred_fallthru
        _
    $region40: #{conv2d_3x3_pallas.1} parent=5 // pred_fallthru
      _
  $region6: #{conv2d_3x3_pallas.1} parent=0 // loop_footer
    %s13 = sadd.s32 1, %s9
  $region7: #{conv2d_3x3_pallas.1} parent=0 // loop_footer_branch
    %8 = sbr.rel target = $region3
  $region8: #{conv2d_3x3_pallas.1} parent=0 // loop_exit
    _

</llo_original>
